<compile_context>
chip_gen: v7x
topology: tpu7x:2x2x1
jax: 0.10.0
libtpu: 0.0.40
codegen_flags: <defaults>
</compile_context>

<pallas_src>
import jax
import jax.numpy as jnp
from jax.experimental import pallas as pl
from jax.experimental.pallas import tpu as pltpu


def _round_up(x, m):
    return (x + m - 1) // m * m


def _choose_group(n, cin, itemsize):
    """Smallest divisor g of n with g*cin filling the sublanes for this dtype."""
    target = max(8, 32 // max(int(itemsize), 1))   # 8 rows f32, 16 bf16, 32 int8
    best = 1
    for g in range(1, n + 1):
        if n % g:
            continue
        best = g
        if g * cin >= target:
            break
    return best


def _conv1x1_kernel(x_ref, wt_ref, b_ref, o_ref):
    # x_ref: (gCin, T)  wt_ref: (gCout, gCin)  b_ref: (gCout, 1) f32  o_ref: (gCout, T)
    acc = jnp.dot(wt_ref[...], x_ref[...], preferred_element_type=jnp.float32)
    o_ref[...] = (acc + b_ref[...]).astype(o_ref.dtype)


def _conv1x1_pallas_impl(x_nchw, weight, bias, *,
                         lane_tile_cap=32768,
                         vmem_budget_bytes=6 * 1024 * 1024):
    """1x1 convolution: (N, Cin, H, W) -> (N, Cout, H, W) via lane-dense Pallas matmul."""
    N, Cin, H, W = x_nchw.shape
    Cout = weight.shape[1]
    hw = H * W
    itemsize = jnp.dtype(x_nchw.dtype).itemsize

    # --- fold batch onto sublanes (block-diagonal weight) ---
    g = _choose_group(N, Cin, itemsize)
    rin, rout = g * Cin, g * Cout
    nb = N // g
    x3 = x_nchw.reshape(nb, rin, hw)                       # pure reshape, no copy

    wt = weight.T.astype(x_nchw.dtype)                     # (Cout, Cin)
    wt_bd = jnp.kron(jnp.eye(g, dtype=wt.dtype), wt)       # (g*Cout, g*Cin) block-diag
    b_bd = jnp.tile(bias.astype(jnp.float32), g).reshape(rout, 1)

    # --- adaptive lane tile: multiple of 128, bounded by cap and VMEM budget ---
    hw_r = _round_up(hw, 128)
    per_lane_bytes = 2 * (rin + rout) * itemsize           # double-buffered in + out
    budget_tile = max(128, (vmem_budget_bytes // per_lane_bytes) // 128 * 128)
    cap = max(128, (int(lane_tile_cap) // 128) * 128)      # sanitize caller value
    tile = max(128, min(hw_r, cap, budget_tile))
    # v7x: keep >= 2 parallel grid blocks so both TensorCores get work.
    while nb * pl.cdiv(hw, tile) < 2 and tile > 128:
        tile = max(128, (tile // 2) // 128 * 128)

    grid = (nb, pl.cdiv(hw, tile))                         # ragged tail masked by Pallas

    out3 = pl.pallas_call(
        _conv1x1_kernel,
        out_shape=jax.ShapeDtypeStruct((nb, rout, hw), x_nchw.dtype),
        grid_spec=pltpu.PrefetchScalarGridSpec(
            num_scalar_prefetch=0,
            grid=grid,
            in_specs=[
                pl.BlockSpec((None, rin, tile), lambda n, j: (n, 0, j)),
                pl.BlockSpec((rout, rin), lambda n, j: (0, 0)),
                pl.BlockSpec((rout, 1), lambda n, j: (0, 0)),
            ],
            out_specs=pl.BlockSpec((None, rout, tile), lambda n, j: (n, 0, j)),
        ),
        compiler_params=pltpu.CompilerParams(
            dimension_semantics=("parallel", "parallel"),
            vmem_limit_bytes=32 * 1024 * 1024),
    )(x3, wt_bd, b_bd)

    return out3.reshape(N, Cout, H, W)


# --- custom VJP so detach / no_grad semantics are real under jax.grad ---
def _make_conv1x1(compute_input_grad):
    @jax.custom_vjp
    def conv(x_nchw, weight, bias):
        return _conv1x1_pallas_impl(x_nchw, weight, bias)

    def fwd(x, w, b):
        return _conv1x1_pallas_impl(x, w, b), (x, w)

    def bwd(res, gy):
        x, w = res
        if compute_input_grad:
            gx = jnp.einsum("io,nohw->nihw", w, gy)
        else:
            # AdversarialLoss always detaches the input: skip the dense gx
            # einsum (a full extra HBM pass over gy) -- cheap zeros broadcast.
            gx = jnp.zeros_like(x)
        gw = jnp.einsum("nihw,nohw->io", x, gy)
        gb = jnp.sum(gy, axis=(0, 2, 3))
        return gx, gw, gb

    conv.defvjp(fwd, bwd)
    return conv


conv1x1_pallas = _make_conv1x1(compute_input_grad=True)
conv1x1_pallas_detached = _make_conv1x1(compute_input_grad=False)


class AdversarialLoss:
    """JAX port of the PyTorch AdversarialLoss module."""

    def __init__(self, weight=1.0, beta=1.0):
        self.weight = weight
        self.beta = beta

    def __call__(self, codebook_mapping_layers, zq_nonphylo):
        # Forward values of both PyTorch branches are identical, so evaluate
        # the mapping once.  Branch 1: grads reach only the mapping params
        # (input detached).  Branch 2: no grads at all.
        y = codebook_mapping_layers(jax.lax.stop_gradient(zq_nonphylo))
        return (y, jax.lax.stop_gradient(y))


if __name__ == "__main__":
    key = jax.random.PRNGKey(0)
    k_x, k_w, k_b = jax.random.split(key, 3)

    # NCHW latent zq_nonphylo, small shapes consistent with the module.
    N, C, H, W = 2, 4, 16, 16
    zq_nonphylo = jax.random.normal(k_x, (N, C, H, W), dtype=jnp.float32)

    # Deterministic synthetic parameters for the codebook mapping (1x1 conv C->C).
    w = jax.random.normal(k_w, (C, C), dtype=jnp.float32) * 0.1
    b = jax.random.normal(k_b, (C,), dtype=jnp.float32) * 0.1

    loss_mod = AdversarialLoss(weight=1.0, beta=1.0)

    def forward(w_, b_, zq_):
        # Input is always detached by AdversarialLoss -> use the variant whose
        # backward skips the dead gx pass.
        mapping = lambda t: conv1x1_pallas_detached(t, w_, b_)
        return loss_mod(mapping, zq_)

    out_detached, out_learning = jax.jit(forward)(w, b, zq_nonphylo)
    jax.block_until_ready(out_detached)
    jax.block_until_ready(out_learning)

    # Forward reference check against plain-JAX 1x1 conv.
    ref = jnp.einsum("io,nihw->nohw", w, zq_nonphylo) + b[None, :, None, None]
    assert out_detached.shape == (N, C, H, W)
    assert out_learning.shape == (N, C, H, W)
    assert jnp.allclose(out_detached, ref, atol=1e-5)
    assert jnp.allclose(out_learning, ref, atol=1e-5)

    # Gradient-semantics check: branch 1 feeds grads into (w, b) only; branch 2
    # (stop_gradient) and the detached input contribute nothing.
    def scalar_loss(w_, b_, zq_):
        a, a_nograd = forward(w_, b_, zq_)
        return jnp.sum(a * a) + jnp.sum(a_nograd)

    gw, gb, gz = jax.grad(scalar_loss, argnums=(0, 1, 2))(w, b, zq_nonphylo)
    gy = 2.0 * out_detached
    gw_ref = jnp.einsum("nihw,nohw->io", zq_nonphylo, gy)
    gb_ref = jnp.sum(gy, axis=(0, 2, 3))
    assert jnp.allclose(gw, gw_ref, rtol=1e-4, atol=1e-3)
    assert jnp.allclose(gb, gb_ref, rtol=1e-4, atol=1e-3)
    assert jnp.allclose(gz, jnp.zeros_like(gz))

    print("KERNEL_OK")
</pallas_src>

<mosaic_0001>
module attributes {stable_mosaic.version = 11 : i64} {
  func.func @_conv1x1_kernel(%arg0: i32, %arg1: i32, %arg2: memref<1x8x128xf32, #tpu.memory_space<vmem>>, %arg3: memref<8x8xf32, #tpu.memory_space<vmem>>, %arg4: memref<8x1xf32, #tpu.memory_space<vmem>>, %arg5: memref<1x8x128xf32, #tpu.memory_space<vmem>>) attributes {dimension_semantics = [#tpu.dimension_semantics<parallel>, #tpu.dimension_semantics<parallel>], iteration_bounds = array<i64: 1, 2>, scalar_prefetch = 0 : i64, scratch_operands = 0 : i64, tpu.core_type = #tpu.core_type<tc>, window_params = [{transform_indices = @transform_0, window_bounds = array<i64: 1, 8, 128>}, {pipeline_mode = #tpu.pipeline_mode<synchronous>, transform_indices = @transform_1, window_bounds = array<i64: 8, 8>}, {pipeline_mode = #tpu.pipeline_mode<synchronous>, transform_indices = @transform_2, window_bounds = array<i64: 8, 1>}, {transform_indices = @transform_3, window_bounds = array<i64: 1, 8, 128>}]} {
    %c0 = arith.constant 0 : index
    %c0_0 = arith.constant 0 : index
    %0 = vector.load %arg3[%c0, %c0_0] : memref<8x8xf32, #tpu.memory_space<vmem>>, vector<8x8xf32>
    %c0_1 = arith.constant 0 : index
    %c0_2 = arith.constant 0 : index
    %c0_3 = arith.constant 0 : index
    %1 = vector.load %arg2[%c0_1, %c0_2, %c0_3] : memref<1x8x128xf32, #tpu.memory_space<vmem>>, vector<1x8x128xf32>
    %2 = vector.shape_cast %1 : vector<1x8x128xf32> to vector<8x128xf32>
    %cst = arith.constant dense<0.000000e+00> : vector<8x128xf32>
    %3 = tpu.matmul %0, %2, %cst {dimension_numbers = #tpu.dot_dimension_numbers<[1], [0], [0], [1], [0, 0, 1, 1], [], []>} : vector<8x8xf32>, vector<8x128xf32>, vector<8x128xf32> -> vector<8x128xf32>
    %c0_4 = arith.constant 0 : index
    %c0_5 = arith.constant 0 : index
    %4 = vector.load %arg4[%c0_4, %c0_5] : memref<8x1xf32, #tpu.memory_space<vmem>>, vector<8x1xf32>
    %5 = vector.broadcast %4 : vector<8x1xf32> to vector<8x128xf32>
    %6 = arith.addf %3, %5 : vector<8x128xf32>
    %c0_6 = arith.constant 0 : index
    %c0_7 = arith.constant 0 : index
    %c0_8 = arith.constant 0 : index
    %7 = vector.load %arg5[%c0_6, %c0_7, %c0_8] : memref<1x8x128xf32, #tpu.memory_space<vmem>>, vector<1x8x128xf32>
    %8 = vector.shape_cast %7 : vector<1x8x128xf32> to vector<8x128xf32>
    %9 = vector.shape_cast %6 : vector<8x128xf32> to vector<1x8x128xf32>
    tpu.vector_store %arg5[%c0_6, %c0_7, %c0_8], %9 {strides = array<i32>} : memref<1x8x128xf32, #tpu.memory_space<vmem>>, vector<1x8x128xf32>,
    return
  }
  func.func @transform_0(%arg0: i32, %arg1: i32) -> (i32, i32, i32) {
    %c0_i32 = arith.constant 0 : i32
    %c0_i32_0 = arith.constant 0 : i32
    return %arg0, %c0_i32, %arg1 : i32, i32, i32
  }
  func.func @transform_1(%arg0: i32, %arg1: i32) -> (i32, i32) {
    %c0_i32 = arith.constant 0 : i32
    %c0_i32_0 = arith.constant 0 : i32
    %c0_i32_1 = arith.constant 0 : i32
    return %c0_i32, %c0_i32_0 : i32, i32
  }
  func.func @transform_2(%arg0: i32, %arg1: i32) -> (i32, i32) {
    %c0_i32 = arith.constant 0 : i32
    %c0_i32_0 = arith.constant 0 : i32
    %c0_i32_1 = arith.constant 0 : i32
    return %c0_i32, %c0_i32_0 : i32, i32
  }
  func.func @transform_3(%arg0: i32, %arg1: i32) -> (i32, i32, i32) {
    %c0_i32 = arith.constant 0 : i32
    %c0_i32_0 = arith.constant 0 : i32
    return %arg0, %c0_i32, %arg1 : i32, i32, i32
  }
}

</mosaic_0001>

<llo_original>
// kernel: tile.8
$region0: #{tile.8}
  #allocation0 [shape = 's32[1]{0}', space=sflag, size = 0x4, scoped, tag = 'scoped memory for tile.8']
  %s0 = inlined_call_operand.vmem [shape: f32[4], index: 0, kind: input, shape index: {}]
  %s1 = inlined_call_operand.vmem [shape: f32[2,4], index: 1, kind: output, shape index: {}]
  // Predicated region
  $region2: #{tile.8} parent=0 // pred_check
    _
  $region3: #{tile.8} parent=0 // pred_check_branch
    %3 = sbr.rel (0) target = $region5
  $region4: #{tile.8} parent=0 // pred_region
    _
  $region5: #{tile.8} parent=0 // pred_fallthru
    _
  %v4 = vld [vmem:[%s0] ss:$0 sm:$0xff]
  %5 = vst [vmem:[%s1] sm:$0x3] %v4

// kernel: tile.0
$region0: #{tile.0}
  %s0 = inlined_call_operand.vmem [shape: f32[2,4], index: 0, kind: input, shape index: {}]
  %s1 = inlined_call_operand.vmem [shape: f32[8,1], index: 1, kind: output, shape index: {}]
  $region1: #{tile.0} parent=0
    #allocation0 [shape = 'u8[4096]{0}', space=vmem, size = 0x1000, scoped, tag = 'scoped mem for input reshape']
    %s3 = sshllo.u32 0, 2
    %v4 = vld [vmem:[%s0] sm:%s3]
    %5 = vst [vmem:[#allocation0] sm:%s3] %v4
    %v6 = vld [vmem:[#allocation0] sm:$0x3]
    %vm7 = vcmask 7168
    %8 = vst.msk [vmem:[%s1] ss:$4 sm:$0x3] %vm7, %v6
    %v9 = vld [vmem:[#allocation0] sm:$0x3]
    %10 = vrot.lane.b32.xlu0 %v9, 127
    %v11 = vpop.permute.xlu0 %10
    %vm12 = vcmask 7168
    %s13 = scalar_lea.vmem %s1, 1
    %14 = vst.msk [vmem:[%s13] ss:$4 sm:$0x3] %vm12, %v11
    %v15 = vld [vmem:[#allocation0] sm:$0x3]
    %16 = vrot.lane.b32.xlu0 %v15, 126
    %v17 = vpop.permute.xlu0 %16
    %vm18 = vcmask 7168
    %s19 = scalar_lea.vmem %s1, 2
    %20 = vst.msk [vmem:[%s19] ss:$4 sm:$0x3] %vm18, %v17
    %v21 = vld [vmem:[#allocation0] sm:$0x3]
    %22 = vrot.lane.b32.xlu0 %v21, 125
    %v23 = vpop.permute.xlu0 %22
    %vm24 = vcmask 7168
    %s25 = scalar_lea.vmem %s1, 3
    %26 = vst.msk [vmem:[%s25] ss:$4 sm:$0x3] %vm24, %v23

// kernel: forward.1
$region0: #{forward.1}
  #allocation0 [shape = 'u32[]', space=smem, size = 0x4, offset = 0x4, fixed_abs, tag = 'smem constant byte address 0x4 - core index']
  #allocation1 [shape = 'u32[144,128]{1,0:T(1,128)}', space=vmem, size = 0x12000, scoped, tag = 'internal scratch']
  %s0 = inlined_call_operand.vmem [shape: f32[1,8,256], index: 0, kind: input, shape index: {}]
  %s1 = inlined_call_operand.vmem [shape: f32[8,8], index: 1, kind: input, shape index: {}]
  %s2 = inlined_call_operand.vmem [shape: f32[8,1], index: 2, kind: input, shape index: {}]
  %s3 = inlined_call_operand.vmem [shape: f32[1,8,256], index: 3, kind: output, shape index: {}]
  %s4 = sld [smem:[#allocation0]]
  $region45: #{forward.1} parent=0
    _
  %s6 = ssub.s32 1, %s4
  %s7 = scalar_select 0, %s6, %s4
  loop: start=0, step=1, limit=4
  $region2: #{forward.1} parent=0 // loop_pre_header
    _
  $region3: #{forward.1} parent=0 // loop_header
    %s9 = sphi 0, %s13
    %p10 = scmp.ge.s32.totalorder %s9, 4
    %s16 = sphi 0, %s28
    %s17 = sphi 0, %s24
    %s18 = sphi 0, %s16
    %s19 = sphi 0, %s17
    %s20 = sphi 0, %s18
    %s21 = sphi 0, %s19
    %s33 = sphi 0, %s35
    %s36 = sphi 0, %s33
    %s37 = sphi 0, %s36
    %s53 = sphi 0, %s37
    %s57 = sphi 0, %s57
    %s59 = sphi 0, %s57
    %s60 = sphi 0, %s59
    %s74 = sphi 0, %s60
    %s78 = sphi 0, %s78
    %s80 = sphi 0, %s78
    %s81 = sphi 0, %s80
    %s95 = sphi 0, %s81
    %s103 = sphi 0, %s105
    %s106 = sphi 0, %s103
    %s107 = sphi 0, %s106
    %s123 = sphi 0, %s107
  $region4: #{forward.1} parent=0 // loop_header_branch
    %12 = sbr.rel (%p10) target = $region8
  $region5: #{forward.1} parent=0 // loop_body
    %s14 = ssub.s32 %s9, 1
    %s15 = ssub.s32 %s9, 2
    %s22 = sadd.s32 1, %s17
    %p23 = scmp.ge.s32.totalorder %s22, 2
    %s24 = scalar_select %p23, 0, %s22
    %s25 = sadd.s32 1, %s16
    %s26 = scalar_select %p23, %s25, %s16
    %p27 = scmp.ge.s32.totalorder %s26, 1
    %s28 = scalar_select %p27, 0, %s26
    %s29 = ssub.s32 %s16, %s28
    %s30 = ssub.s32 %s17, %s24
    %s31 = sor.u32 %s29, %s30
    %p32 = scmp.eq.s32.totalorder %s31, 0
    %s34 = sadd.s32 %s33, 1
    %s35 = scalar_select %p32, %s33, %s34
    %p38 = pneg %p32
    %p39 = scmp.eq.s32.totalorder %s9, 1
    %p40 = por %p38, %p39
    %p41 = scmp.ne.s32.totalorder %s33, %s36
    %p42 = scmp.eq.s32.totalorder %s9, 0
    %p43 = por %p41, %p42
    %p44 = scmp.ne.s32.totalorder %s33, %s36
    %p45 = scmp.eq.s32.totalorder %s14, 1
    %p46 = por %p44, %p45
    %p47 = scmp.ne.s32.totalorder %s36, %s37
    %p48 = scmp.eq.s32.totalorder %s14, 0
    %p49 = por %p47, %p48
    %p50 = scmp.ne.s32.totalorder %s36, %s37
    %p51 = scmp.eq.s32.totalorder %s15, 1
    %p52 = por %p50, %p51
    %p54 = scmp.ne.s32.totalorder %s37, %s53
    %p55 = scmp.eq.s32.totalorder %s15, 0
    %p56 = por %p54, %p55
    %s58 = sadd.s32 %s57, 1
    %p61 = scmp.eq.s32.totalorder %s9, 1
    %p62 = scmp.ne.s32.totalorder %s57, %s59
    %p63 = scmp.eq.s32.totalorder %s9, 0
    %p64 = por %p62, %p63
    %p65 = scmp.ne.s32.totalorder %s57, %s59
    %p66 = scmp.eq.s32.totalorder %s14, 1
    %p67 = por %p65, %p66
    %p68 = scmp.ne.s32.totalorder %s59, %s60
    %p69 = scmp.eq.s32.totalorder %s14, 0
    %p70 = por %p68, %p69
    %p71 = scmp.ne.s32.totalorder %s59, %s60
    %p72 = scmp.eq.s32.totalorder %s15, 1
    %p73 = por %p71, %p72
    %p75 = scmp.ne.s32.totalorder %s60, %s74
    %p76 = scmp.eq.s32.totalorder %s15, 0
    %p77 = por %p75, %p76
    %s79 = sadd.s32 %s78, 1
    %p82 = scmp.eq.s32.totalorder %s9, 1
    %p83 = scmp.ne.s32.totalorder %s78, %s80
    %p84 = scmp.eq.s32.totalorder %s9, 0
    %p85 = por %p83, %p84
    %p86 = scmp.ne.s32.totalorder %s78, %s80
    %p87 = scmp.eq.s32.totalorder %s14, 1
    %p88 = por %p86, %p87
    %p89 = scmp.ne.s32.totalorder %s80, %s81
    %p90 = scmp.eq.s32.totalorder %s14, 0
    %p91 = por %p89, %p90
    %p92 = scmp.ne.s32.totalorder %s80, %s81
    %p93 = scmp.eq.s32.totalorder %s15, 1
    %p94 = por %p92, %p93
    %p96 = scmp.ne.s32.totalorder %s81, %s95
    %p97 = scmp.eq.s32.totalorder %s15, 0
    %p98 = por %p96, %p97
    %s99 = ssub.s32 %s16, %s28
    %s100 = ssub.s32 %s17, %s24
    %s101 = sor.u32 %s99, %s100
    %p102 = scmp.eq.s32.totalorder %s101, 0
    %s104 = sadd.s32 %s103, 1
    %s105 = scalar_select %p102, %s103, %s104
    %p108 = pneg %p102
    %p109 = scmp.eq.s32.totalorder %s9, 1
    %p110 = por %p108, %p109
    %p111 = scmp.ne.s32.totalorder %s103, %s106
    %p112 = scmp.eq.s32.totalorder %s9, 0
    %p113 = por %p111, %p112
    %p114 = scmp.ne.s32.totalorder %s103, %s106
    %p115 = scmp.eq.s32.totalorder %s14, 1
    %p116 = por %p114, %p115
    %p117 = scmp.ne.s32.totalorder %s106, %s107
    %p118 = scmp.eq.s32.totalorder %s14, 0
    %p119 = por %p117, %p118
    %p120 = scmp.ne.s32.totalorder %s106, %s107
    %p121 = scmp.eq.s32.totalorder %s15, 1
    %p122 = por %p120, %p121
    %p124 = scmp.ne.s32.totalorder %s107, %s123
    %p125 = scmp.eq.s32.totalorder %s15, 0
    %p126 = por %p124, %p125
    %p127 = scmp.le.s32.totalorder 1, %s9
    %p128 = scmp.lt.s32.totalorder %s9, 3
    %p129 = pnand %p127, %p128
    %p130 = pneg %p129
    // Predicated region
    $region9: #{forward.1} parent=5 // pred_check
      _
    $region10: #{forward.1} parent=5 // pred_check_branch
      %132 = sbr.rel (%p129) target = $region12
    $region11: #{forward.1} parent=5 // pred_region
      %s133 = ssub.s32 %s9, 1
      // Predicated region
      $region13: #{forward.1} parent=11 // pred_check
        %p134 = pneg %p70
      $region14: #{forward.1} parent=11 // pred_check_branch
        %136 = sbr.rel (%p134) target = $region16
      $region15: #{forward.1} parent=11 // pred_region
        _
      $region16: #{forward.1} parent=11 // pred_fallthru
        _
      // Predicated region
      $region17: #{forward.1} parent=11 // pred_check
        %p137 = pneg %p91
      $region18: #{forward.1} parent=11 // pred_check_branch
        %139 = sbr.rel (%p137) target = $region20
      $region19: #{forward.1} parent=11 // pred_region
        _
      $region20: #{forward.1} parent=11 // pred_fallthru
        _
    $region12: #{forward.1} parent=5 // pred_fallthru
      _
    %p140 = scmp.lt.s32.totalorder %s9, 2
    // Predicated region
    $region21: #{forward.1} parent=5 // pred_check
      %p141 = pneg %p140
    $region22: #{forward.1} parent=5 // pred_check_branch
      %143 = sbr.rel (%p141) target = $region24
    $region23: #{forward.1} parent=5 // pred_region
      // Predicated region
      $region25: #{forward.1} parent=23 // pred_check
        %p144 = pneg %p43
      $region26: #{forward.1} parent=23 // pred_check_branch
        %146 = sbr.rel (%p144) target = $region28
      $region27: #{forward.1} parent=23 // pred_region
        %p147 = scmp.lt.s32.totalorder %s16, 0
        %s148 = scalar_select %p147, %s16, 0
        %p149 = scmp.lt.s32.totalorder %s17, 1
        %s150 = scalar_select %p149, %s17, 1
        %s151 = smul.addr %s148, 2
        %s152 = sadd.s32 %s150, %s151
        %s153 = smul.addr %s152, 8
        %s154 = scalar_lea.vmem %s0, %s153
      $region28: #{forward.1} parent=23 // pred_fallthru
        _
    $region24: #{forward.1} parent=5 // pred_fallthru
      _
    %p155 = scmp.le.s32.totalorder 1, %s9
    %p156 = scmp.lt.s32.totalorder %s9, 3
    %p157 = pnand %p155, %p156
    %p158 = pneg %p157
    // Predicated region
    $region29: #{forward.1} parent=5 // pred_check
      _
    $region30: #{forward.1} parent=5 // pred_check_branch
      %160 = sbr.rel (%p157) target = $region32
    $region31: #{forward.1} parent=5 // pred_region
      %s161 = ssub.s32 %s9, 1
      %p162 = scmp.lt.s32.totalorder %s18, 0
      %s163 = scalar_select %p162, %s18, 0
      %p164 = scmp.lt.s32.totalorder %s19, 1
      %s165 = scalar_select %p164, %s19, 1
      %s166 = smul.addr %s163, 2
      %s167 = sadd.s32 %s165, %s166
      %s168 = smul.addr %s167, 8
      %s169 = scalar_lea.vmem %s0, %s168
      %p170 = pneg %p49
      %p171 = pneg %p46
      %p172 = pneg %p70
      %p173 = pneg %p67
      %p174 = pneg %p91
      %p175 = pneg %p88
      %p176 = pneg %p119
      %p177 = pneg %p116
      %p178 = scmp.lt.s32.totalorder %s18, 0
      %s179 = scalar_select %p178, %s18, 0
      %p180 = scmp.lt.s32.totalorder %s19, 1
      %s181 = scalar_select %p180, %s19, 1
      %s182 = smul.addr %s179, 2
      %s183 = sadd.s32 %s181, %s182
      %s184 = smul.addr %s183, 8
      %s185 = scalar_lea.vmem %s3, %s184
      %p186 = scmp.lt.s32.totalorder %s18, 0
      %s187 = scalar_select %p186, %s18, 0
      %p188 = scmp.lt.s32.totalorder %s19, 1
      %s189 = scalar_select %p188, %s19, 1
      %s190 = smul.addr %s187, 2
      %s191 = sadd.s32 %s189, %s190
      %s192 = smul.addr %s191, 8
      %s193 = scalar_lea.vmem %s0, %s192
      %p194 = scmp.lt.s32.totalorder %s18, 0
      %s195 = scalar_select %p194, %s18, 0
      %p196 = scmp.lt.s32.totalorder %s19, 1
      %s197 = scalar_select %p196, %s19, 1
      %s198 = smul.addr %s195, 2
      %s199 = sadd.s32 %s197, %s198
      %s200 = smul.addr %s199, 8
      %s201 = scalar_lea.vmem %s3, %s200
      %v202 = vld [vmem:[%s1] sm:$0xff]
      %v203 = vld [vmem:[%s193] sm:$0xff]
      %v204 = vld [vmem:[%s2] sm:$0xff]
      %206 = vset.pattern.permute.xlu0 0
      %207 = vperm.xlu0 %206, %v204
      %v208 = vpop.permute.xlu0 %207
      %vm210 = vcmask 64512
      %v212 = vsel %vm210, %v202, 0
      %214 = vmatprep.subr.mxu0 0.0
      %215 = vmatpush1.msra.mxu0 %v203
      %216 = vmatprep.subr.mxu0 0.0
      %217 = vmatpush1.msra.mxu0 0.0
      %218 = vmatprep.subr.mxu0 0.0
      %219 = vmatpush1.msra.mxu0 0.0
      %220 = vmatprep.subr.mxu0 0.0
      %221 = vmatpush1.msra.mxu0 0.0
      %222 = vmatprep.subr.mxu0 0.0
      %223 = vmatpush1.msra.mxu0 0.0
      %224 = vmatprep.subr.mxu0 0.0
      %225 = vmatpush1.msra.mxu0 0.0
      %226 = vmatprep.subr.mxu0 0.0
      %227 = vmatpush1.msra.mxu0 0.0
      %228 = vmatprep.subr.mxu0 0.0
      %229 = vmatpush1.msra.mxu0 0.0
      %230 = vmatprep.subr.mxu0 0.0
      %231 = vmatpush1.msra.mxu0 0.0
      %232 = vmatprep.subr.mxu0 0.0
      %233 = vmatpush1.msra.mxu0 0.0
      %234 = vmatprep.subr.mxu0 0.0
      %235 = vmatpush1.msra.mxu0 0.0
      %236 = vmatprep.subr.mxu0 0.0
      %237 = vmatpush1.msra.mxu0 0.0
      %238 = vmatprep.subr.mxu0 0.0
      %239 = vmatpush1.msra.mxu0 0.0
      %240 = vmatprep.subr.mxu0 0.0
      %241 = vmatpush1.msra.mxu0 0.0
      %242 = vmatprep.subr.mxu0 0.0
      %243 = vmatpush1.msra.mxu0 0.0
      %244 = vmatprep.subr.mxu0 0.0
      %245 = vmatpush1.msra.mxu0 0.0
      %246 = vmatprep.subr.mxu0 0.0
      %247 = vmatpush1.msra.mxu0 0.0
      %248 = vmatprep.subr.mxu0 0.0
      %249 = vmatpush1.msra.mxu0 0.0
      %250 = vmatprep.subr.mxu0 0.0
      %251 = vmatpush1.msra.mxu0 0.0
      %252 = vmatprep.subr.mxu0 0.0
      %253 = vmatpush1.msra.mxu0 0.0
      %254 = vmatprep.subr.mxu0 0.0
      %255 = vmatpush1.msra.mxu0 0.0
      %256 = vmatprep.subr.mxu0 0.0
      %257 = vmatpush1.msra.mxu0 0.0
      %258 = vmatprep.subr.mxu0 0.0
      %259 = vmatpush1.msra.mxu0 0.0
      %260 = vmatprep.subr.mxu0 0.0
      %261 = vmatpush1.msra.mxu0 0.0
      %262 = vmatprep.subr.mxu0 0.0
      %263 = vmatpush1.msra.mxu0 0.0
      %264 = vmatprep.subr.mxu0 0.0
      %265 = vmatpush1.msra.mxu0 0.0
      %266 = vmatprep.subr.mxu0 0.0
      %267 = vmatpush1.msra.mxu0 0.0
      %268 = vmatprep.subr.mxu0 0.0
      %269 = vmatpush1.msra.mxu0 0.0
      %270 = vmatprep.subr.mxu0 0.0
      %271 = vmatpush1.msra.mxu0 0.0
      %272 = vmatprep.subr.mxu0 0.0
      %273 = vmatpush1.msra.mxu0 0.0
      %274 = vmatprep.subr.mxu0 0.0
      %275 = vmatpush1.msra.mxu0 0.0
      %276 = vmatprep.subr.mxu0 0.0
      %277 = vmatpush1.msra.mxu0 0.0
      %278 = vmatprep.mubr.f32.mxu0 0.0
      %279 = vmatmul.mubr.f32.gmra.mrb[0].mxu0 %v212
      %v280 = vpop.f32.mrb[0].mxu0
      %v281 = vadd.f32 %v208, %v280
      %v282 = vpop.f32.mrb[0].mxu0
      %283 = vdwg.mxu0
      %284 = vst [vmem:[%s201] sm:$0xff] %v281
      %p285 = scmp.lt.s32.totalorder %s18, 0
      %s286 = scalar_select %p285, %s18, 0
      %p287 = scmp.lt.s32.totalorder %s19, 1
      %s288 = scalar_select %p287, %s19, 1
      %s289 = smul.addr %s286, 2
      %s290 = sadd.s32 %s288, %s289
      %s291 = smul.addr %s290, 8
      %s292 = scalar_lea.vmem %s3, %s291
      // Predicated region
      $region33: #{forward.1} parent=31 // pred_check
        %p293 = pneg %p116
      $region34: #{forward.1} parent=31 // pred_check_branch
        %295 = sbr.rel (%p293) target = $region36
      $region35: #{forward.1} parent=31 // pred_region
        _
      $region36: #{forward.1} parent=31 // pred_fallthru
        _
    $region32: #{forward.1} parent=5 // pred_fallthru
      _
    %p296 = scmp.le.s32.totalorder 2, %s9
    // Predicated region
    $region37: #{forward.1} parent=5 // pred_check
      %p297 = pneg %p296
    $region38: #{forward.1} parent=5 // pred_check_branch
      %299 = sbr.rel (%p297) target = $region40
    $region39: #{forward.1} parent=5 // pred_region
      %s300 = ssub.s32 %s9, 2
      // Predicated region
      $region41: #{forward.1} parent=39 // pred_check
        %p301 = pneg %p122
      $region42: #{forward.1} parent=39 // pred_check_branch
        %303 = sbr.rel (%p301) target = $region44
      $region43: #{forward.1} parent=39 // pred_region
        %p304 = scmp.lt.s32.totalorder %s20, 0
        %s305 = scalar_select %p304, %s20, 0
        %p306 = scmp.lt.s32.totalorder %s21, 1
        %s307 = scalar_select %p306, %s21, 1
        %s308 = smul.addr %s305, 2
        %s309 = sadd.s32 %s307, %s308
        %s310 = smul.addr %s309, 8
        %s311 = scalar_lea.vmem %s3, %s310
      $region44: #{forward.1} parent=39 // pred_fallthru
        _
    $region40: #{forward.1} parent=5 // pred_fallthru
      _
  $region6: #{forward.1} parent=0 // loop_footer
    %s13 = sadd.s32 1, %s9
  $region7: #{forward.1} parent=0 // loop_footer_branch
    %8 = sbr.rel target = $region3
  $region8: #{forward.1} parent=0 // loop_exit
    _

</llo_original>
